<compile_context>
chip_gen: v5e
topology: v5e:2x2
jax: 0.10.0
libtpu: 0.0.40
codegen_flags: <defaults>
</compile_context>

<pallas_src>
import math
import numpy as np
import jax
import jax.numpy as jnp
from jax.experimental import pallas as pl
from jax.experimental.pallas import tpu as pltpu

# ---- small, module-consistent shapes ----
S, B = 8, 2          # seq, batch
E = 24               # num_features (divisible by nhead)
H = 3                # nhead
DH = E // H          # head dim = 8
FF = 64              # dim_feedforward
N = S * B            # rows processed per kernel invocation
EPS = 1e-5           # PyTorch LayerNorm default eps

# ---- packed weight-slab row layout (all matrix row offsets % 8 == 0) ----
R_WQKV = 0            # (E, 3E)  = (24, 72)   Q cols pre-scaled by 1/sqrt(DH)
R_WO = R_WQKV + E     # 24: (E, E)  = (24, 24)  pre-scaled by resweight
R_W1 = R_WO + E       # 48: (E, FF) = (24, 64)
R_W2 = R_W1 + E       # 72: (FF, E) = (64, 24)  pre-scaled by resweight
R_BQKV = R_W2 + FF    # 136: qkv bias (72)      Q third pre-scaled by 1/sqrt(DH)
R_BO = R_BQKV + 1     # 137: out-proj bias (24) pre-scaled by resweight
R_B1 = R_BO + 1       # 138: ff bias 1 (64)
R_B2 = R_B1 + 1       # 139: ff bias 2 (24)     pre-scaled by resweight
R_G = R_B2 + 1        # 140: LayerNorm gamma (24)
R_BETA = R_G + 1      # 141: LayerNorm beta (24)
SLAB_ROWS = 144       # padded to a multiple of 8
SLAB_COLS = 128       # lane-dense


def _layernorm(x, g, b):
    mu = jnp.mean(x, axis=-1, keepdims=True)
    xc = x - mu
    var = jnp.mean(xc * xc, axis=-1, keepdims=True)
    return xc * jax.lax.rsqrt(var + EPS) * g + b


def rezero_layer_kernel(x_ref, w_ref, out_ref):
    # x rows are (s, b) row-major, i.e. row n belongs to batch n % B.
    x = x_ref[...]                                   # (N, E)

    # static, tile-aligned carves of the single packed slab
    wqkv = w_ref[R_WQKV:R_WQKV + E, 0:3 * E]         # (24, 72)
    w1t = w_ref[R_W1:R_W1 + E, 0:FF]                 # (24, 64)
    w2t = w_ref[R_W2:R_W2 + FF, 0:E]                 # (64, 24)  rw folded in
    bqkv = w_ref[R_BQKV:R_BQKV + 1, 0:3 * E]         # (1, 72)   scale folded in (Q)
    bo = w_ref[R_BO:R_BO + 1, 0:E]                   # (1, 24)   rw folded in
    b1 = w_ref[R_B1:R_B1 + 1, 0:FF]                  # (1, 64)
    b2 = w_ref[R_B2:R_B2 + 1, 0:E]                   # (1, 24)   rw folded in
    g = w_ref[R_G:R_G + 1, 0:E]                      # (1, 24)
    beta = w_ref[R_BETA:R_BETA + 1, 0:E]             # (1, 24)

    # ---- multi-head self-attention ----
    # fused QKV projection: (16,24) @ (24,72); 1/sqrt(DH) pre-folded into Q
    qkv = jnp.dot(x, wqkv, preferred_element_type=jnp.float32) + bqkv

    # block-diagonal additive mask so the two batches never attend to each other
    ri = jax.lax.broadcasted_iota(jnp.int32, (N, N), 0)
    ci = jax.lax.broadcasted_iota(jnp.int32, (N, N), 1)
    neg = jnp.where((ri % B) == (ci % B), 0.0, -1e30)     # (N, N)

    dn = (((1,), (1,)), ((), ()))                    # contract dim 1 of both: no kh.T
    attn = None
    for h in range(H):                               # H=3, fully unrolled
        qh = qkv[:, h * DH:(h + 1) * DH]                              # (N, DH)
        kh = qkv[:, E + h * DH:E + (h + 1) * DH]
        vh = qkv[:, 2 * E + h * DH:2 * E + (h + 1) * DH]
        s = jax.lax.dot_general(qh, kh, dn,
                                preferred_element_type=jnp.float32) + neg
        s = s - jnp.max(s, axis=-1, keepdims=True)
        p = jnp.exp(s)
        # exact divide kept (pl.reciprocal(approx=True) risks the 1e-4 check)
        p = p / jnp.sum(p, axis=-1, keepdims=True)
        ctx_h = jnp.dot(p, vh, preferred_element_type=jnp.float32)    # (N, DH)
        # per-head out-projection accumulation (no lane concat); rw folded into Wo
        woh = w_ref[R_WO + h * DH:R_WO + (h + 1) * DH, 0:E]           # (DH, E)
        part = jnp.dot(ctx_h, woh, preferred_element_type=jnp.float32)
        attn = part if attn is None else attn + part
    attn = attn + bo                                 # == resweight * attn_out

    # dropout1 / dropout / dropout2: inference mode -> identity
    # ---- ReZero residual #1 + post-LayerNorm (norm1) ----
    src1 = _layernorm(x + attn, g, beta)

    # ---- feed-forward ----
    h1 = jnp.maximum(
        jnp.dot(src1, w1t, preferred_element_type=jnp.float32) + b1, 0.0)
    ff = jnp.dot(h1, w2t, preferred_element_type=jnp.float32) + b2   # == rw * ff

    # ---- ReZero residual #2 + post-LayerNorm (module reuses norm1) ----
    out_ref[...] = _layernorm(src1 + ff, g, beta)


def rezero_encoder_layer(src_sbe, w_slab):
    """src_sbe: (S, B, E) float32 (PyTorch layout). Returns (S, B, E)."""
    x2d = src_sbe.reshape(N, E)                      # free reshape, no transpose
    vmem = pltpu.MemorySpace.VMEM
    out2d = pl.pallas_call(
        rezero_layer_kernel,
        out_shape=jax.ShapeDtypeStruct((N, E), jnp.float32),
        in_specs=[
            pl.BlockSpec(memory_space=vmem),         # x (16, 24)
            pl.BlockSpec(memory_space=vmem),         # packed weight slab (144, 128)
        ],
        out_specs=pl.BlockSpec(memory_space=vmem),
        input_output_aliases={0: 0},                 # output reuses x's HBM buffer
    )(x2d, w_slab)
    return out2d.reshape(S, B, E)                    # free reshape back


def make_params(key):
    ks = jax.random.split(key, 8)
    in_proj_w = jax.random.normal(ks[0], (3 * E, E), jnp.float32) * 0.1
    in_proj_b = jax.random.normal(ks[1], (3 * E,), jnp.float32) * 0.1
    out_proj_w = jax.random.normal(ks[2], (E, E), jnp.float32) * 0.1
    out_proj_b = jax.random.normal(ks[3], (E,), jnp.float32) * 0.1
    w1 = jax.random.normal(ks[4], (FF, E), jnp.float32) * 0.1
    b1 = jax.random.normal(ks[5], (FF,), jnp.float32) * 0.1
    w2 = jax.random.normal(ks[6], (E, FF), jnp.float32) * 0.1
    b2 = jax.random.normal(ks[7], (E,), jnp.float32) * 0.1
    gamma = jnp.ones((E,), jnp.float32)
    beta = jnp.zeros((E,), jnp.float32)
    resweight = jnp.float32(0.5)
    raw = dict(in_proj_w=in_proj_w, in_proj_b=in_proj_b,
               out_proj_w=out_proj_w, out_proj_b=out_proj_b,
               w1=w1, b1=b1, w2=w2, b2=b2,
               gamma=gamma, beta=beta, resweight=resweight)

    # ---- host-side constant folding + single-slab packing (all float32) ----
    scale = 1.0 / math.sqrt(DH)
    rw = float(resweight)

    wqkv = np.asarray(in_proj_w, np.float32).T.copy()      # (E, 3E)
    wqkv[:, :E] *= scale                                   # fold 1/sqrt(DH) into Q
    bqkv = np.asarray(in_proj_b, np.float32).copy()
    bqkv[:E] *= scale

    wo = np.asarray(out_proj_w, np.float32).T * rw          # (E, E), fold resweight
    bo = np.asarray(out_proj_b, np.float32) * rw
    w1t = np.asarray(w1, np.float32).T                      # (E, FF)
    w2t = np.asarray(w2, np.float32).T * rw                 # (FF, E), fold resweight
    b2f = np.asarray(b2, np.float32) * rw

    slab = np.zeros((SLAB_ROWS, SLAB_COLS), np.float32)
    slab[R_WQKV:R_WQKV + E, :3 * E] = wqkv
    slab[R_WO:R_WO + E, :E] = wo
    slab[R_W1:R_W1 + E, :FF] = w1t
    slab[R_W2:R_W2 + FF, :E] = w2t
    slab[R_BQKV, :3 * E] = bqkv
    slab[R_BO, :E] = bo
    slab[R_B1, :FF] = np.asarray(b1, np.float32)
    slab[R_B2, :E] = b2f
    slab[R_G, :E] = np.asarray(gamma, np.float32)
    slab[R_BETA, :E] = np.asarray(beta, np.float32)

    return raw, jnp.asarray(slab)


def ref_forward(src, p):
    """Pure-JAX reference mirroring the PyTorch module (use_LayerNorm='post', eval)."""
    x = src                                                  # (S, B, E)
    Wq, Wk, Wv = p['in_proj_w'][:E], p['in_proj_w'][E:2 * E], p['in_proj_w'][2 * E:]
    bq, bk, bv = p['in_proj_b'][:E], p['in_proj_b'][E:2 * E], p['in_proj_b'][2 * E:]
    q = jnp.einsum('sbe,fe->sbf', x, Wq) + bq
    k = jnp.einsum('sbe,fe->sbf', x, Wk) + bk
    v = jnp.einsum('sbe,fe->sbf', x, Wv) + bv
    qh = q.reshape(S, B, H, DH) * (DH ** -0.5)
    kh = k.reshape(S, B, H, DH)
    vh = v.reshape(S, B, H, DH)
    scores = jnp.einsum('sbhd,tbhd->bhst', qh, kh)
    pw = jax.nn.softmax(scores, axis=-1)
    ctx = jnp.einsum('bhst,tbhd->sbhd', pw, vh).reshape(S, B, E)
    attn = jnp.einsum('sbe,fe->sbf', ctx, p['out_proj_w']) + p['out_proj_b']

    def ln(t):
        mu = t.mean(-1, keepdims=True)
        var = ((t - mu) ** 2).mean(-1, keepdims=True)
        return (t - mu) / jnp.sqrt(var + EPS) * p['gamma'] + p['beta']

    rw = p['resweight']
    src1 = ln(x + rw * attn)
    ff = jnp.maximum(jnp.einsum('sbe,fe->sbf', src1, p['w1']) + p['b1'], 0.0)
    ff = jnp.einsum('sbf,ef->sbe', ff, p['w2']) + p['b2']
    return ln(src1 + rw * ff)


if __name__ == "__main__":
    key = jax.random.PRNGKey(0)
    k_src, k_par = jax.random.split(key)
    src = jax.random.normal(k_src, (S, B, E), jnp.float32)   # (seq, batch, features)

    raw_params, w_slab = make_params(k_par)

    # reference first (kernel aliases/donates its own reshaped copy of src)
    ref = jax.block_until_ready(ref_forward(src, raw_params))

    out = rezero_encoder_layer(src, w_slab)
    out = jax.block_until_ready(out)

    np.testing.assert_allclose(np.asarray(out), np.asarray(ref), rtol=1e-4, atol=1e-4)
    print("KERNEL_OK")
</pallas_src>

<mosaic_0001>
module attributes {stable_mosaic.version = 11 : i64} {
  func.func @rezero_layer_kernel(%arg0: memref<16x24xf32, #tpu.memory_space<vmem>>, %arg1: memref<144x128xf32, #tpu.memory_space<vmem>>, %arg2: memref<16x24xf32, #tpu.memory_space<vmem>>) attributes {dimension_semantics = [], scalar_prefetch = 0 : i64, scratch_operands = 0 : i64, tpu.core_type = #tpu.core_type<tc>} {
    %c0 = arith.constant 0 : index
    %c0_0 = arith.constant 0 : index
    %0 = vector.load %arg0[%c0, %c0_0] : memref<16x24xf32, #tpu.memory_space<vmem>>, vector<16x24xf32>
    %c0_1 = arith.constant 0 : index
    %c0_2 = arith.constant 0 : index
    %1 = vector.load %arg1[%c0_1, %c0_2] : memref<144x128xf32, #tpu.memory_space<vmem>>, vector<24x72xf32>
    %c48 = arith.constant 48 : index
    %c0_3 = arith.constant 0 : index
    %2 = vector.load %arg1[%c48, %c0_3] : memref<144x128xf32, #tpu.memory_space<vmem>>, vector<24x64xf32>
    %c72 = arith.constant 72 : index
    %c0_4 = arith.constant 0 : index
    %3 = vector.load %arg1[%c72, %c0_4] : memref<144x128xf32, #tpu.memory_space<vmem>>, vector<64x24xf32>
    %c136 = arith.constant 136 : index
    %c0_5 = arith.constant 0 : index
    %4 = vector.load %arg1[%c136, %c0_5] : memref<144x128xf32, #tpu.memory_space<vmem>>, vector<1x72xf32>
    %c137 = arith.constant 137 : index
    %c0_6 = arith.constant 0 : index
    %5 = vector.load %arg1[%c137, %c0_6] : memref<144x128xf32, #tpu.memory_space<vmem>>, vector<1x24xf32>
    %c138 = arith.constant 138 : index
    %c0_7 = arith.constant 0 : index
    %6 = vector.load %arg1[%c138, %c0_7] : memref<144x128xf32, #tpu.memory_space<vmem>>, vector<1x64xf32>
    %c139 = arith.constant 139 : index
    %c0_8 = arith.constant 0 : index
    %7 = vector.load %arg1[%c139, %c0_8] : memref<144x128xf32, #tpu.memory_space<vmem>>, vector<1x24xf32>
    %c140 = arith.constant 140 : index
    %c0_9 = arith.constant 0 : index
    %8 = vector.load %arg1[%c140, %c0_9] : memref<144x128xf32, #tpu.memory_space<vmem>>, vector<1x24xf32>
    %c141 = arith.constant 141 : index
    %c0_10 = arith.constant 0 : index
    %9 = vector.load %arg1[%c141, %c0_10] : memref<144x128xf32, #tpu.memory_space<vmem>>, vector<1x24xf32>
    %cst = arith.constant dense<0.000000e+00> : vector<16x72xf32>
    %10 = tpu.matmul %0, %1, %cst {dimension_numbers = #tpu.dot_dimension_numbers<[1], [0], [0], [1], [0, 0, 1, 1], [], []>} : vector<16x24xf32>, vector<24x72xf32>, vector<16x72xf32> -> vector<16x72xf32>
    %11 = vector.broadcast %4 : vector<1x72xf32> to vector<16x72xf32>
    %12 = arith.addf %10, %11 : vector<16x72xf32>
    %13 = tpu.iota {dimensions = array<i32: 0>} : vector<16x16xi32>
    %14 = tpu.iota {dimensions = array<i32: 1>} : vector<16x16xi32>
    %c2_i32 = arith.constant 2 : i32
    %c0_i32 = arith.constant 0 : i32
    %15 = arith.cmpi eq, %c2_i32, %c0_i32 : i32
    %c1_i32 = arith.constant 1 : i32
    %16 = arith.select %15, %c1_i32, %c2_i32 : i32
    %17 = vector.broadcast %16 : i32 to vector<16x16xi32>
    %18 = arith.remsi %13, %17 : vector<16x16xi32>
    %c0_i32_11 = arith.constant 0 : i32
    %19 = vector.broadcast %c0_i32_11 : i32 to vector<16x16xi32>
    %20 = arith.cmpi ne, %18, %19 : vector<16x16xi32>
    %c0_i32_12 = arith.constant 0 : i32
    %21 = vector.broadcast %c0_i32_12 : i32 to vector<16x16xi32>
    %22 = arith.cmpi slt, %18, %21 : vector<16x16xi32>
    %c0_i32_13 = arith.constant 0 : i32
    %23 = arith.cmpi slt, %16, %c0_i32_13 : i32
    %24 = vector.broadcast %23 : i1 to vector<16x16xi1>
    %25 = vector.broadcast %24 : vector<16x16xi1> to vector<16x16xi1>
    %26 = arith.xori %22, %25 : vector<16x16xi1>
    %27 = arith.andi %26, %20 : vector<16x16xi1>
    %28 = vector.broadcast %16 : i32 to vector<16x16xi32>
    %29 = arith.addi %18, %28 : vector<16x16xi32>
    %30 = arith.select %27, %29, %18 : vector<16x16xi1>, vector<16x16xi32>
    %c2_i32_14 = arith.constant 2 : i32
    %c0_i32_15 = arith.constant 0 : i32
    %31 = arith.cmpi eq, %c2_i32_14, %c0_i32_15 : i32
    %c1_i32_16 = arith.constant 1 : i32
    %32 = arith.select %31, %c1_i32_16, %c2_i32_14 : i32
    %33 = vector.broadcast %32 : i32 to vector<16x16xi32>
    %34 = arith.remsi %14, %33 : vector<16x16xi32>
    %c0_i32_17 = arith.constant 0 : i32
    %35 = vector.broadcast %c0_i32_17 : i32 to vector<16x16xi32>
    %36 = arith.cmpi ne, %34, %35 : vector<16x16xi32>
    %c0_i32_18 = arith.constant 0 : i32
    %37 = vector.broadcast %c0_i32_18 : i32 to vector<16x16xi32>
    %38 = arith.cmpi slt, %34, %37 : vector<16x16xi32>
    %c0_i32_19 = arith.constant 0 : i32
    %39 = arith.cmpi slt, %32, %c0_i32_19 : i32
    %40 = vector.broadcast %39 : i1 to vector<16x16xi1>
    %41 = vector.broadcast %40 : vector<16x16xi1> to vector<16x16xi1>
    %42 = arith.xori %38, %41 : vector<16x16xi1>
    %43 = arith.andi %42, %36 : vector<16x16xi1>
    %44 = vector.broadcast %32 : i32 to vector<16x16xi32>
    %45 = arith.addi %34, %44 : vector<16x16xi32>
    %46 = arith.select %43, %45, %34 : vector<16x16xi1>, vector<16x16xi32>
    %47 = arith.cmpi eq, %30, %46 : vector<16x16xi32>
    %cst_20 = arith.constant 0.000000e+00 : f32
    %cst_21 = arith.constant -1.000000e+30 : f32
    %48 = vector.broadcast %cst_20 : f32 to vector<16x16xf32>
    %49 = vector.broadcast %cst_21 : f32 to vector<16x16xf32>
    %50 = arith.select %47, %48, %49 : vector<16x16xi1>, vector<16x16xf32>
    %51 = vector.extract_strided_slice %12 {offsets = [0, 0], sizes = [16, 8], strides = [1, 1]} : vector<16x72xf32> to vector<16x8xf32>
    %52 = vector.extract_strided_slice %12 {offsets = [0, 24], sizes = [16, 8], strides = [1, 1]} : vector<16x72xf32> to vector<16x8xf32>
    %53 = vector.extract_strided_slice %12 {offsets = [0, 48], sizes = [16, 8], strides = [1, 1]} : vector<16x72xf32> to vector<16x8xf32>
    %cst_22 = arith.constant dense<0.000000e+00> : vector<16x16xf32>
    %54 = tpu.matmul %51, %52, %cst_22 {dimension_numbers = #tpu.dot_dimension_numbers<[1], [1], [0], [0], [0, 0, 1, 0], [], []>} : vector<16x8xf32>, vector<16x8xf32>, vector<16x16xf32> -> vector<16x16xf32>
    %55 = arith.addf %54, %50 : vector<16x16xf32>
    %cst_23 = arith.constant dense<0xFF800000> : vector<16xf32>
    %56 = vector.multi_reduction <maximumf>, %55, %cst_23 [1] : vector<16x16xf32> to vector<16xf32>
    %57 = vector.shape_cast %56 : vector<16xf32> to vector<16x1xf32>
    %58 = vector.broadcast %57 : vector<16x1xf32> to vector<16x16xf32>
    %59 = arith.subf %55, %58 : vector<16x16xf32>
    %60 = math.exp %59 : vector<16x16xf32>
    %cst_24 = arith.constant dense<0.000000e+00> : vector<16xf32>
    %61 = vector.multi_reduction <add>, %60, %cst_24 [1] : vector<16x16xf32> to vector<16xf32>
    %62 = vector.shape_cast %61 : vector<16xf32> to vector<16x1xf32>
    %63 = vector.broadcast %62 : vector<16x1xf32> to vector<16x16xf32>
    %64 = arith.divf %60, %63 : vector<16x16xf32>
    %cst_25 = arith.constant dense<0.000000e+00> : vector<16x8xf32>
    %65 = tpu.matmul %64, %53, %cst_25 {dimension_numbers = #tpu.dot_dimension_numbers<[1], [0], [0], [1], [0, 0, 1, 1], [], []>} : vector<16x16xf32>, vector<16x8xf32>, vector<16x8xf32> -> vector<16x8xf32>
    %c24 = arith.constant 24 : index
    %c0_26 = arith.constant 0 : index
    %66 = vector.load %arg1[%c24, %c0_26] : memref<144x128xf32, #tpu.memory_space<vmem>>, vector<8x24xf32>
    %cst_27 = arith.constant dense<0.000000e+00> : vector<16x24xf32>
    %67 = tpu.matmul %65, %66, %cst_27 {dimension_numbers = #tpu.dot_dimension_numbers<[1], [0], [0], [1], [0, 0, 1, 1], [], []>} : vector<16x8xf32>, vector<8x24xf32>, vector<16x24xf32> -> vector<16x24xf32>
    %68 = vector.extract_strided_slice %12 {offsets = [0, 8], sizes = [16, 8], strides = [1, 1]} : vector<16x72xf32> to vector<16x8xf32>
    %69 = vector.extract_strided_slice %12 {offsets = [0, 32], sizes = [16, 8], strides = [1, 1]} : vector<16x72xf32> to vector<16x8xf32>
    %70 = vector.extract_strided_slice %12 {offsets = [0, 56], sizes = [16, 8], strides = [1, 1]} : vector<16x72xf32> to vector<16x8xf32>
    %cst_28 = arith.constant dense<0.000000e+00> : vector<16x16xf32>
    %71 = tpu.matmul %68, %69, %cst_28 {dimension_numbers = #tpu.dot_dimension_numbers<[1], [1], [0], [0], [0, 0, 1, 0], [], []>} : vector<16x8xf32>, vector<16x8xf32>, vector<16x16xf32> -> vector<16x16xf32>
    %72 = arith.addf %71, %50 : vector<16x16xf32>
    %cst_29 = arith.constant dense<0xFF800000> : vector<16xf32>
    %73 = vector.multi_reduction <maximumf>, %72, %cst_29 [1] : vector<16x16xf32> to vector<16xf32>
    %74 = vector.shape_cast %73 : vector<16xf32> to vector<16x1xf32>
    %75 = vector.broadcast %74 : vector<16x1xf32> to vector<16x16xf32>
    %76 = arith.subf %72, %75 : vector<16x16xf32>
    %77 = math.exp %76 : vector<16x16xf32>
    %cst_30 = arith.constant dense<0.000000e+00> : vector<16xf32>
    %78 = vector.multi_reduction <add>, %77, %cst_30 [1] : vector<16x16xf32> to vector<16xf32>
    %79 = vector.shape_cast %78 : vector<16xf32> to vector<16x1xf32>
    %80 = vector.broadcast %79 : vector<16x1xf32> to vector<16x16xf32>
    %81 = arith.divf %77, %80 : vector<16x16xf32>
    %cst_31 = arith.constant dense<0.000000e+00> : vector<16x8xf32>
    %82 = tpu.matmul %81, %70, %cst_31 {dimension_numbers = #tpu.dot_dimension_numbers<[1], [0], [0], [1], [0, 0, 1, 1], [], []>} : vector<16x16xf32>, vector<16x8xf32>, vector<16x8xf32> -> vector<16x8xf32>
    %c32 = arith.constant 32 : index
    %c0_32 = arith.constant 0 : index
    %83 = vector.load %arg1[%c32, %c0_32] : memref<144x128xf32, #tpu.memory_space<vmem>>, vector<8x24xf32>
    %cst_33 = arith.constant dense<0.000000e+00> : vector<16x24xf32>
    %84 = tpu.matmul %82, %83, %cst_33 {dimension_numbers = #tpu.dot_dimension_numbers<[1], [0], [0], [1], [0, 0, 1, 1], [], []>} : vector<16x8xf32>, vector<8x24xf32>, vector<16x24xf32> -> vector<16x24xf32>
    %85 = arith.addf %67, %84 : vector<16x24xf32>
    %86 = vector.extract_strided_slice %12 {offsets = [0, 16], sizes = [16, 8], strides = [1, 1]} : vector<16x72xf32> to vector<16x8xf32>
    %87 = vector.extract_strided_slice %12 {offsets = [0, 40], sizes = [16, 8], strides = [1, 1]} : vector<16x72xf32> to vector<16x8xf32>
    %88 = vector.extract_strided_slice %12 {offsets = [0, 64], sizes = [16, 8], strides = [1, 1]} : vector<16x72xf32> to vector<16x8xf32>
    %cst_34 = arith.constant dense<0.000000e+00> : vector<16x16xf32>
    %89 = tpu.matmul %86, %87, %cst_34 {dimension_numbers = #tpu.dot_dimension_numbers<[1], [1], [0], [0], [0, 0, 1, 0], [], []>} : vector<16x8xf32>, vector<16x8xf32>, vector<16x16xf32> -> vector<16x16xf32>
    %90 = arith.addf %89, %50 : vector<16x16xf32>
    %cst_35 = arith.constant dense<0xFF800000> : vector<16xf32>
    %91 = vector.multi_reduction <maximumf>, %90, %cst_35 [1] : vector<16x16xf32> to vector<16xf32>
    %92 = vector.shape_cast %91 : vector<16xf32> to vector<16x1xf32>
    %93 = vector.broadcast %92 : vector<16x1xf32> to vector<16x16xf32>
    %94 = arith.subf %90, %93 : vector<16x16xf32>
    %95 = math.exp %94 : vector<16x16xf32>
    %cst_36 = arith.constant dense<0.000000e+00> : vector<16xf32>
    %96 = vector.multi_reduction <add>, %95, %cst_36 [1] : vector<16x16xf32> to vector<16xf32>
    %97 = vector.shape_cast %96 : vector<16xf32> to vector<16x1xf32>
    %98 = vector.broadcast %97 : vector<16x1xf32> to vector<16x16xf32>
    %99 = arith.divf %95, %98 : vector<16x16xf32>
    %cst_37 = arith.constant dense<0.000000e+00> : vector<16x8xf32>
    %100 = tpu.matmul %99, %88, %cst_37 {dimension_numbers = #tpu.dot_dimension_numbers<[1], [0], [0], [1], [0, 0, 1, 1], [], []>} : vector<16x16xf32>, vector<16x8xf32>, vector<16x8xf32> -> vector<16x8xf32>
    %c40 = arith.constant 40 : index
    %c0_38 = arith.constant 0 : index
    %101 = vector.load %arg1[%c40, %c0_38] : memref<144x128xf32, #tpu.memory_space<vmem>>, vector<8x24xf32>
    %cst_39 = arith.constant dense<0.000000e+00> : vector<16x24xf32>
    %102 = tpu.matmul %100, %101, %cst_39 {dimension_numbers = #tpu.dot_dimension_numbers<[1], [0], [0], [1], [0, 0, 1, 1], [], []>} : vector<16x8xf32>, vector<8x24xf32>, vector<16x24xf32> -> vector<16x24xf32>
    %103 = arith.addf %85, %102 : vector<16x24xf32>
    %104 = vector.broadcast %5 : vector<1x24xf32> to vector<16x24xf32>
    %105 = arith.addf %103, %104 : vector<16x24xf32>
    %106 = arith.addf %0, %105 : vector<16x24xf32>
    %cst_40 = arith.constant dense<0.000000e+00> : vector<16xf32>
    %107 = vector.multi_reduction <add>, %106, %cst_40 [1] : vector<16x24xf32> to vector<16xf32>
    %108 = vector.shape_cast %107 : vector<16xf32> to vector<16x1xf32>
    %cst_41 = arith.constant 2.400000e+01 : f32
    %109 = vector.broadcast %cst_41 : f32 to vector<16x1xf32>
    %110 = arith.divf %108, %109 : vector<16x1xf32>
    %111 = vector.broadcast %110 : vector<16x1xf32> to vector<16x24xf32>
    %112 = arith.subf %106, %111 : vector<16x24xf32>
    %113 = arith.mulf %112, %112 : vector<16x24xf32>
    %cst_42 = arith.constant dense<0.000000e+00> : vector<16xf32>
    %114 = vector.multi_reduction <add>, %113, %cst_42 [1] : vector<16x24xf32> to vector<16xf32>
    %115 = vector.shape_cast %114 : vector<16xf32> to vector<16x1xf32>
    %cst_43 = arith.constant 2.400000e+01 : f32
    %116 = vector.broadcast %cst_43 : f32 to vector<16x1xf32>
    %117 = arith.divf %115, %116 : vector<16x1xf32>
    %cst_44 = arith.constant 9.99999974E-6 : f32
    %118 = vector.broadcast %cst_44 : f32 to vector<16x1xf32>
    %119 = arith.addf %117, %118 : vector<16x1xf32>
    %120 = math.rsqrt %119 : vector<16x1xf32>
    %121 = vector.broadcast %120 : vector<16x1xf32> to vector<16x24xf32>
    %122 = arith.mulf %112, %121 : vector<16x24xf32>
    %123 = vector.broadcast %8 : vector<1x24xf32> to vector<16x24xf32>
    %124 = arith.mulf %122, %123 : vector<16x24xf32>
    %125 = vector.broadcast %9 : vector<1x24xf32> to vector<16x24xf32>
    %126 = arith.addf %124, %125 : vector<16x24xf32>
    %cst_45 = arith.constant dense<0.000000e+00> : vector<16x64xf32>
    %127 = tpu.matmul %126, %2, %cst_45 {dimension_numbers = #tpu.dot_dimension_numbers<[1], [0], [0], [1], [0, 0, 1, 1], [], []>} : vector<16x24xf32>, vector<24x64xf32>, vector<16x64xf32> -> vector<16x64xf32>
    %128 = vector.broadcast %6 : vector<1x64xf32> to vector<16x64xf32>
    %129 = arith.addf %127, %128 : vector<16x64xf32>
    %cst_46 = arith.constant 0.000000e+00 : f32
    %130 = vector.broadcast %cst_46 : f32 to vector<16x64xf32>
    %131 = arith.maximumf %129, %130 : vector<16x64xf32>
    %cst_47 = arith.constant dense<0.000000e+00> : vector<16x24xf32>
    %132 = tpu.matmul %131, %3, %cst_47 {dimension_numbers = #tpu.dot_dimension_numbers<[1], [0], [0], [1], [0, 0, 1, 1], [], []>} : vector<16x64xf32>, vector<64x24xf32>, vector<16x24xf32> -> vector<16x24xf32>
    %133 = vector.broadcast %7 : vector<1x24xf32> to vector<16x24xf32>
    %134 = arith.addf %132, %133 : vector<16x24xf32>
    %135 = arith.addf %126, %134 : vector<16x24xf32>
    %cst_48 = arith.constant dense<0.000000e+00> : vector<16xf32>
    %136 = vector.multi_reduction <add>, %135, %cst_48 [1] : vector<16x24xf32> to vector<16xf32>
    %137 = vector.shape_cast %136 : vector<16xf32> to vector<16x1xf32>
    %cst_49 = arith.constant 2.400000e+01 : f32
    %138 = vector.broadcast %cst_49 : f32 to vector<16x1xf32>
    %139 = arith.divf %137, %138 : vector<16x1xf32>
    %140 = vector.broadcast %139 : vector<16x1xf32> to vector<16x24xf32>
    %141 = arith.subf %135, %140 : vector<16x24xf32>
    %142 = arith.mulf %141, %141 : vector<16x24xf32>
    %cst_50 = arith.constant dense<0.000000e+00> : vector<16xf32>
    %143 = vector.multi_reduction <add>, %142, %cst_50 [1] : vector<16x24xf32> to vector<16xf32>
    %144 = vector.shape_cast %143 : vector<16xf32> to vector<16x1xf32>
    %cst_51 = arith.constant 2.400000e+01 : f32
    %145 = vector.broadcast %cst_51 : f32 to vector<16x1xf32>
    %146 = arith.divf %144, %145 : vector<16x1xf32>
    %cst_52 = arith.constant 9.99999974E-6 : f32
    %147 = vector.broadcast %cst_52 : f32 to vector<16x1xf32>
    %148 = arith.addf %146, %147 : vector<16x1xf32>
    %149 = math.rsqrt %148 : vector<16x1xf32>
    %150 = vector.broadcast %149 : vector<16x1xf32> to vector<16x24xf32>
    %151 = arith.mulf %141, %150 : vector<16x24xf32>
    %152 = vector.broadcast %8 : vector<1x24xf32> to vector<16x24xf32>
    %153 = arith.mulf %151, %152 : vector<16x24xf32>
    %154 = vector.broadcast %9 : vector<1x24xf32> to vector<16x24xf32>
    %155 = arith.addf %153, %154 : vector<16x24xf32>
    %c0_53 = arith.constant 0 : index
    %c0_54 = arith.constant 0 : index
    %156 = vector.load %arg2[%c0_53, %c0_54] : memref<16x24xf32, #tpu.memory_space<vmem>>, vector<16x24xf32>
    tpu.vector_store %arg2[%c0_53, %c0_54], %155 {strides = array<i32>} : memref<16x24xf32, #tpu.memory_space<vmem>>, vector<16x24xf32>,
    return
  }
}

</mosaic_0001>

<llo_original>
// kernel: tpu_custom_call.1
$region0: #{tpu_custom_call.1}
  #allocation0 [shape = 'u32[]', space=smem, size = 0x4, offset = 0x4, fixed_abs, tag = 'smem constant byte address 0x4 - core index']
  #allocation1 [shape = 'u32[72,128]{1,0:T(1,128)}', space=vmem, size = 0x9000, scoped, tag = 'internal scratch']
  %s0 = inlined_call_operand.hbm [shape: f32[16,24], index: 0, kind: input, shape index: {}, may-alias: {0,2}]
  %s1 = inlined_call_operand.hbm [shape: f32[144,128], index: 1, kind: input, shape index: {}]
  %s2 = inlined_call_operand.hbm [shape: f32[16,24], index: 2, kind: output, shape index: {}, may-alias: {0,2}]
  %s3 = sld [smem:[#allocation0]]
  $region26: #{tpu_custom_call.1} parent=0
    _
  %s5 = ssub.s32 1, %s3
  %s6 = scalar_select 0, %s5, %s3
  $region1: #{tpu_custom_call.1} parent=0
    #allocation2 [shape = 'u8[8192]{0}', space=vmem, size = 0x2000, scoped, tag = 'input window, operand 0, single buffered']
    #allocation3 [shape = 's32[1]{0}', space=sflag, size = 0x4, scoped, tag = 'scoped memory for tpu_custom_call.1']
    #allocation4 [shape = 's32[1]{0}', space=sflag, size = 0x4, scoped, tag = 'scoped memory for tpu_custom_call.1']
    #allocation5 [shape = 'u8[73728]{0}', space=vmem, size = 0x12000, scoped, tag = 'input window, operand 1, single buffered']
    #allocation6 [shape = 's32[1]{0}', space=sflag, size = 0x4, scoped, tag = 'scoped memory for tpu_custom_call.1']
    #allocation7 [shape = 'u8[8192]{0}', space=vmem, size = 0x2000, scoped, tag = 'output window, operand 0, single buffered']
    %7 = vsyncpa [#allocation3], 0
    %8 = vsyncpa [#allocation6], 0
    %9 = vsyncpa [#allocation4], 0
    // Predicated region
    $region2: #{tpu_custom_call.1} parent=1 // pred_check
      _
    $region3: #{tpu_custom_call.1} parent=1 // pred_check_branch
      %11 = sbr.rel (0) target = $region5
    $region4: #{tpu_custom_call.1} parent=1 // pred_region
      %13 = vsyncadd [#allocation3], 0
      %s14 = sshll.u32 %s0, 4
      %s15 = int_to_ptr.hbm [resolvable:$true] %s14
      %s16 = sshll.u32 [#allocation2], 4
      %s17 = int_to_ptr.vmem [resolvable:$true] %s16
      %22 = dma.hbm_to_vmem [thread:$0]  %s15, 256, %s17, [#allocation3], 128, 128, 8
    $region5: #{tpu_custom_call.1} parent=1 // pred_fallthru
      _
    // Predicated region
    $region6: #{tpu_custom_call.1} parent=1 // pred_check
      _
    $region7: #{tpu_custom_call.1} parent=1 // pred_check_branch
      %24 = sbr.rel (0) target = $region9
    $region8: #{tpu_custom_call.1} parent=1 // pred_region
      %26 = vsyncadd [#allocation6], 0
      %s27 = sshll.u32 %s1, 4
      %s28 = int_to_ptr.hbm [resolvable:$true] %s27
      %s29 = sshll.u32 [#allocation5], 4
      %s30 = int_to_ptr.vmem [resolvable:$true] %s29
      %35 = dma.hbm_to_vmem [thread:$0]  %s28, 2304, %s30, [#allocation6], 128, 128, 8
    $region9: #{tpu_custom_call.1} parent=1 // pred_fallthru
      _
    // Predicated region
    $region10: #{tpu_custom_call.1} parent=1 // pred_check
      _
    $region11: #{tpu_custom_call.1} parent=1 // pred_check_branch
      %37 = sbr.rel (0) target = $region13
    $region12: #{tpu_custom_call.1} parent=1 // pred_region
      %39 = dma.done [#allocation3], 256
    $region13: #{tpu_custom_call.1} parent=1 // pred_fallthru
      _
    // Predicated region
    $region14: #{tpu_custom_call.1} parent=1 // pred_check
      _
    $region15: #{tpu_custom_call.1} parent=1 // pred_check_branch
      %41 = sbr.rel (0) target = $region17
    $region16: #{tpu_custom_call.1} parent=1 // pred_region
      %43 = dma.done [#allocation6], 2304
    $region17: #{tpu_custom_call.1} parent=1 // pred_fallthru
      _
    %v44 = vld [vmem:[#allocation2] sm:$0xff]
    %v45 = vld [vmem:[#allocation2 + $0x8] sm:$0xff]
    %v46 = vld [vmem:[#allocation5] sm:$0xff]
    %v47 = vld [vmem:[#allocation5 + $0x8] sm:$0xff]
    %v48 = vld [vmem:[#allocation5 + $0x10] sm:$0xff]
    %v49 = vld [vmem:[#allocation5 + $0x30] sm:$0xff]
    %v50 = vld [vmem:[#allocation5 + $0x38] sm:$0xff]
    %v51 = vld [vmem:[#allocation5 + $0x40] sm:$0xff]
    %v52 = vld [vmem:[#allocation5 + $0x48] sm:$0xff]
    %v53 = vld [vmem:[#allocation5 + $0x50] sm:$0xff]
    %v54 = vld [vmem:[#allocation5 + $0x58] sm:$0xff]
    %v55 = vld [vmem:[#allocation5 + $0x60] sm:$0xff]
    %v56 = vld [vmem:[#allocation5 + $0x68] sm:$0xff]
    %v57 = vld [vmem:[#allocation5 + $0x70] sm:$0xff]
    %v58 = vld [vmem:[#allocation5 + $0x78] sm:$0xff]
    %v59 = vld [vmem:[#allocation5 + $0x80] sm:$0xff]
    %v60 = vld [vmem:[#allocation5 + $0x88] sm:$0x1]
    %v61 = vld [vmem:[#allocation5 + $0x89] sm:$0x1]
    %v62 = vld [vmem:[#allocation5 + $0x8a] sm:$0x1]
    %v63 = vld [vmem:[#allocation5 + $0x8b] sm:$0x1]
    %v64 = vld [vmem:[#allocation5 + $0x8c] sm:$0x1]
    %v65 = vld [vmem:[#allocation5 + $0x8d] sm:$0x1]
    %v66 = vperm.slane %v60, 0
    %vm67 = vcmask 195584
    %v69 = vsel %vm67, %v44, 0
    %v72 = vsel %vm67, %v45, 0
    %74 = vmatpush.msra.mxu0 0.0
    %75 = vmatpush.msra.mxu0 0.0
    %76 = vmatpush.msra.mxu0 0.0
    %77 = vmatpush.msra.mxu0 0.0
    %78 = vmatpush.msra.mxu0 0.0
    %79 = vmatpush.msra.mxu0 0.0
    %80 = vmatpush.msra.mxu0 0.0
    %81 = vmatpush.msra.mxu0 0.0
    %82 = vmatpush.msra.mxu0 0.0
    %83 = vmatpush.msra.mxu0 0.0
    %84 = vmatpush.msra.mxu0 0.0
    %85 = vmatpush.msra.mxu0 0.0
    %86 = vmatpush.msra.mxu0 0.0
    %87 = vmatpush.msra.mxu0 %v48
    %88 = vmatpush.msra.mxu0 %v47
    %89 = vmatpush.msra.mxu0 %v46
    %90 = vmatmul.f32.gmra.mxu0 %v69
    %v91 = vpop.f32.mrf.mxu0
    %v92 = vadd.f32 %v66, %v91
    %93 = vmatmul.f32.gmra.mxu0 %v72
    %v94 = vpop.f32.mrf.mxu0
    %v95 = vadd.f32 %v66, %v94
    %96 = vdwg.mxu0
    %v97 = vlaneseq
    %v98 = vshrl.u32 %v97, 7
    %v99 = vadd.s32 %v98, 8
    %v100 = vlaneseq
    %v101 = vand.u32 %v100, 127
    %vm102 = vcmp.lt.s32.totalorder %v98, 0
    %v103 = vsub.s32 0, %v98
    %v104 = vsel %vm102, %v103, %v98
    %v105 = vshrl.u32 %v104, 1
    %v106 = vand.u32 %v104, 1
    %v107 = vsub.s32 0, %v106
    %v108 = vsel %vm102, %v107, %v106
    %vm109 = vcmp.lt.s32.totalorder %v99, 0
    %v110 = vsub.s32 0, %v99
    %v111 = vsel %vm109, %v110, %v99
    %v112 = vshrl.u32 %v111, 1
    %v113 = vand.u32 %v111, 1
    %v114 = vsub.s32 0, %v113
    %v115 = vsel %vm109, %v114, %v113
    %vm116 = vcmp.ne.s32.totalorder %v108, 0
    %vm117 = vcmp.ne.s32.totalorder %v115, 0
    %vm118 = vcmp.lt.s32.totalorder %v108, 0
    %vm119 = vcmp.lt.s32.totalorder %v115, 0
    %vm120 = vmand %vm118, %vm116
    %vm121 = vmand %vm119, %vm117
    %v122 = vadd.s32 %v108, 2
    %v123 = vadd.s32 %v115, 2
    %v124 = vsel %vm120, %v122, %v108
    %v125 = vsel %vm121, %v123, %v115
    %vm126 = vcmp.lt.s32.totalorder %v101, 0
    %v127 = vsub.s32 0, %v101
    %v128 = vsel %vm126, %v127, %v101
    %v129 = vshrl.u32 %v128, 1
    %v130 = vand.u32 %v128, 1
    %v131 = vsub.s32 0, %v130
    %v132 = vsel %vm126, %v131, %v130
    %vm133 = vcmp.ne.s32.totalorder %v132, 0
    %vm134 = vcmp.lt.s32.totalorder %v132, 0
    %vm135 = vmand %vm134, %vm133
    %v136 = vadd.s32 %v132, 2
    %v137 = vsel %vm135, %v136, %v132
    %vm138 = vcmp.eq.s32.totalorder %v124, %v137
    %vm139 = vcmp.eq.s32.totalorder %v125, %v137
    %v140 = vsel %vm138, 0.0, -1e+30
    %v141 = vsel %vm139, 0.0, -1e+30
    %144 = vrot.lane.b32.xlu0 %v92, 104
    %v145 = vpop.permute.xlu0 %144
    %146 = vrot.lane.b32.xlu0 %v95, 104
    %v147 = vpop.permute.xlu0 %146
    %vm148 = vcmask 64512
    %v149 = vsel %vm148, %v92, 0
    %v151 = vsel %vm148, %v95, 0
    %v153 = vsel %vm148, %v145, 0
    %v155 = vsel %vm148, %v147, 0
    %157 = vmatpush.xpose.msra.mxu0 0.0
    %158 = vmatpush.xpose.msra.mxu0 0.0
    %159 = vmatpush.xpose.msra.mxu0 0.0
    %160 = vmatpush.xpose.msra.mxu0 0.0
    %161 = vmatpush.xpose.msra.mxu0 0.0
    %162 = vmatpush.xpose.msra.mxu0 0.0
    %163 = vmatpush.xpose.msra.mxu0 0.0
    %164 = vmatpush.xpose.msra.mxu0 0.0
    %165 = vmatpush.xpose.msra.mxu0 0.0
    %166 = vmatpush.xpose.msra.mxu0 0.0
    %167 = vmatpush.xpose.msra.mxu0 0.0
    %168 = vmatpush.xpose.msra.mxu0 0.0
    %169 = vmatpush.xpose.msra.mxu0 0.0
    %170 = vmatpush.xpose.msra.mxu0 0.0
    %171 = vmatpush.xpose.msra.mxu0 %v155
    %172 = vmatpush.xpose.msra.mxu0 %v153
    %173 = vmatmul.f32.gmra.mxu0 %v149
    %v174 = vpop.f32.mrf.mxu0
    %v175 = vadd.f32 %v140, %v174
    %176 = vmatmul.f32.gmra.mxu0 %v151
    %v177 = vpop.f32.mrf.mxu0
    %v178 = vadd.f32 %v141, %v177
    %179 = vdwg.mxu0
    %vm180 = vcmask 130048
    %v181 = vsel %vm180, %v175, -inf
    %182 = vmax.xlane.f32.xlu0 %v181
    %v183 = vpop.xlane.xlu0 %182
    %v184 = vsel %vm180, %v178, -inf
    %185 = vmax.xlane.f32.xlu0 %v184
    %v186 = vpop.xlane.xlu0 %185
    %v187 = vsub.f32 %v175, %v183
    %v188 = vsub.f32 %v178, %v186
    %v189 = vmul.f32 %v187, 1.442695
    %v190 = vpow.pop %v189
    %v191 = vmul.f32 %v188, 1.442695
    %v192 = vpow.pop %v191
    %v193 = vsel %vm180, %v190, 0.0
    %194 = vadd.xlane.f32.xlu0 %v193
    %v195 = vpop.xlane.xlu0 %194
    %v196 = vsel %vm180, %v192, 0.0
    %197 = vadd.xlane.f32.xlu0 %v196
    %v198 = vpop.xlane.xlu0 %197
    %v199 = vrcp.pop %v195
    %v200 = vmul.f32 %v195, %v199
    %v201 = vsub.f32 1.0, %v200
    %v202 = vmul.f32 %v199, %v201
    %v203 = vadd.f32 %v199, %v202
    %vm204 = vweird.f32 %v195
    %vm205 = vweird.f32 %v199
    %vm206 = vmor %vm204, %vm205
    %v207 = vsel %vm206, %v199, %v203
    %v208 = vand.u32 2147483647, %v195
    %vm209 = vcmp.eq.f32.partialorder %v208, 8.507059e+37
    %v210 = vand.u32 %v195, 2147483648
    %v211 = vor.u32 1.1754944e-38, %v210
    %v212 = vsel %vm209, %v211, %v207
    %v213 = vmul.f32 %v190, %v212
    %v214 = vrcp.pop %v198
    %v215 = vmul.f32 %v198, %v214
    %v216 = vsub.f32 1.0, %v215
    %v217 = vmul.f32 %v214, %v216
    %v218 = vadd.f32 %v214, %v217
    %vm219 = vweird.f32 %v198
    %vm220 = vweird.f32 %v214
    %vm221 = vmor %vm219, %vm220
    %v222 = vsel %vm221, %v214, %v218
    %v223 = vand.u32 2147483647, %v198
    %vm224 = vcmp.eq.f32.partialorder %v223, 8.507059e+37
    %v225 = vand.u32 %v198, 2147483648
    %v226 = vor.u32 1.1754944e-38, %v225
    %v227 = vsel %vm224, %v226, %v222
    %v228 = vmul.f32 %v192, %v227
    %229 = vrot.lane.b32.xlu0 %v92, 80
    %v230 = vpop.permute.xlu0 %229
    %231 = vrot.lane.b32.xlu0 %v95, 80
    %v232 = vpop.permute.xlu0 %231
    %v236 = vsel %vm180, %v213, 0
    %v239 = vsel %vm180, %v228, 0
    %241 = vmatpush.msra.mxu0 0.0
    %242 = vmatpush.msra.mxu0 0.0
    %243 = vmatpush.msra.mxu0 0.0
    %244 = vmatpush.msra.mxu0 0.0
    %245 = vmatpush.msra.mxu0 0.0
    %246 = vmatpush.msra.mxu0 0.0
    %247 = vmatpush.msra.mxu0 0.0
    %248 = vmatpush.msra.mxu0 0.0
    %249 = vmatpush.msra.mxu0 0.0
    %250 = vmatpush.msra.mxu0 0.0
    %251 = vmatpush.msra.mxu0 0.0
    %252 = vmatpush.msra.mxu0 0.0
    %253 = vmatpush.msra.mxu0 0.0
    %254 = vmatpush.msra.mxu0 0.0
    %255 = vmatpush.msra.mxu0 %v232
    %256 = vmatpush.msra.mxu0 %v230
    %257 = vmatmul.f32.gmra.mxu0 %v236
    %v258 = vpop.f32.mrf.mxu0
    %v259 = vadd.f32 0.0, %v258
    %260 = vmatmul.f32.gmra.mxu0 %v239
    %v261 = vpop.f32.mrf.mxu0
    %v262 = vadd.f32 0.0, %v261
    %263 = vdwg.mxu0
    %v264 = vld [vmem:[#allocation5 + $0x18] sm:$0xff]
    %265 = vrot.lane.b32.xlu0 %v92, 120
    %v266 = vpop.permute.xlu0 %265
    %267 = vrot.lane.b32.xlu0 %v95, 120
    %v268 = vpop.permute.xlu0 %267
    %269 = vrot.lane.b32.xlu0 %v92, 96
    %v270 = vpop.permute.xlu0 %269
    %271 = vrot.lane.b32.xlu0 %v95, 96
    %v272 = vpop.permute.xlu0 %271
    %v273 = vsel %vm148, %v266, 0
    %v275 = vsel %vm148, %v268, 0
    %v277 = vsel %vm148, %v270, 0
    %v279 = vsel %vm148, %v272, 0
    %281 = vmatpush.xpose.msra.mxu0 0.0
    %282 = vmatpush.xpose.msra.mxu0 0.0
    %283 = vmatpush.xpose.msra.mxu0 0.0
    %284 = vmatpush.xpose.msra.mxu0 0.0
    %285 = vmatpush.xpose.msra.mxu0 0.0
    %286 = vmatpush.xpose.msra.mxu0 0.0
    %287 = vmatpush.xpose.msra.mxu0 0.0
    %288 = vmatpush.xpose.msra.mxu0 0.0
    %289 = vmatpush.xpose.msra.mxu0 0.0
    %290 = vmatpush.xpose.msra.mxu0 0.0
    %291 = vmatpush.xpose.msra.mxu0 0.0
    %292 = vmatpush.xpose.msra.mxu0 0.0
    %293 = vmatpush.xpose.msra.mxu0 0.0
    %294 = vmatpush.xpose.msra.mxu0 0.0
    %295 = vmatpush.xpose.msra.mxu0 %v279
    %296 = vmatpush.xpose.msra.mxu0 %v277
    %297 = vmatmul.f32.gmra.mxu0 %v273
    %v298 = vpop.f32.mrf.mxu0
    %v299 = vadd.f32 %v140, %v298
    %300 = vmatmul.f32.gmra.mxu0 %v275
    %v301 = vpop.f32.mrf.mxu0
    %v302 = vadd.f32 %v141, %v301
    %303 = vdwg.mxu0
    %v304 = vsel %vm180, %v299, -inf
    %305 = vmax.xlane.f32.xlu0 %v304
    %v306 = vpop.xlane.xlu0 %305
    %v307 = vsel %vm180, %v302, -inf
    %308 = vmax.xlane.f32.xlu0 %v307
    %v309 = vpop.xlane.xlu0 %308
    %v310 = vsub.f32 %v299, %v306
    %v311 = vsub.f32 %v302, %v309
    %v312 = vmul.f32 %v310, 1.442695
    %v313 = vpow.pop %v312
    %v314 = vmul.f32 %v311, 1.442695
    %v315 = vpow.pop %v314
    %v316 = vsel %vm180, %v313, 0.0
    %317 = vadd.xlane.f32.xlu0 %v316
    %v318 = vpop.xlane.xlu0 %317
    %v319 = vsel %vm180, %v315, 0.0
    %320 = vadd.xlane.f32.xlu0 %v319
    %v321 = vpop.xlane.xlu0 %320
    %v322 = vrcp.pop %v318
    %v323 = vmul.f32 %v318, %v322
    %v324 = vsub.f32 1.0, %v323
    %v325 = vmul.f32 %v322, %v324
    %v326 = vadd.f32 %v322, %v325
    %vm327 = vweird.f32 %v318
    %vm328 = vweird.f32 %v322
    %vm329 = vmor %vm327, %vm328
    %v330 = vsel %vm329, %v322, %v326
    %v331 = vand.u32 2147483647, %v318
    %vm332 = vcmp.eq.f32.partialorder %v331, 8.507059e+37
    %v333 = vand.u32 %v318, 2147483648
    %v334 = vor.u32 1.1754944e-38, %v333
    %v335 = vsel %vm332, %v334, %v330
    %v336 = vmul.f32 %v313, %v335
    %v337 = vrcp.pop %v321
    %v338 = vmul.f32 %v321, %v337
    %v339 = vsub.f32 1.0, %v338
    %v340 = vmul.f32 %v337, %v339
    %v341 = vadd.f32 %v337, %v340
    %vm342 = vweird.f32 %v321
    %vm343 = vweird.f32 %v337
    %vm344 = vmor %vm342, %vm343
    %v345 = vsel %vm344, %v337, %v341
    %v346 = vand.u32 2147483647, %v321
    %vm347 = vcmp.eq.f32.partialorder %v346, 8.507059e+37
    %v348 = vand.u32 %v321, 2147483648
    %v349 = vor.u32 1.1754944e-38, %v348
    %v350 = vsel %vm347, %v349, %v345
    %v351 = vmul.f32 %v315, %v350
    %352 = vrot.lane.b32.xlu0 %v92, 72
    %v353 = vpop.permute.xlu0 %352
    %354 = vrot.lane.b32.xlu0 %v95, 72
    %v355 = vpop.permute.xlu0 %354
    %v359 = vsel %vm180, %v336, 0
    %v362 = vsel %vm180, %v351, 0
    %364 = vmatpush.msra.mxu0 0.0
    %365 = vmatpush.msra.mxu0 0.0
    %366 = vmatpush.msra.mxu0 0.0
    %367 = vmatpush.msra.mxu0 0.0
    %368 = vmatpush.msra.mxu0 0.0
    %369 = vmatpush.msra.mxu0 0.0
    %370 = vmatpush.msra.mxu0 0.0
    %371 = vmatpush.msra.mxu0 0.0
    %372 = vmatpush.msra.mxu0 0.0
    %373 = vmatpush.msra.mxu0 0.0
    %374 = vmatpush.msra.mxu0 0.0
    %375 = vmatpush.msra.mxu0 0.0
    %376 = vmatpush.msra.mxu0 0.0
    %377 = vmatpush.msra.mxu0 0.0
    %378 = vmatpush.msra.mxu0 %v355
    %379 = vmatpush.msra.mxu0 %v353
    %380 = vmatmul.f32.gmra.mxu0 %v359
    %v381 = vpop.f32.mrf.mxu0
    %v382 = vadd.f32 0.0, %v381
    %383 = vmatmul.f32.gmra.mxu0 %v362
    %v384 = vpop.f32.mrf.mxu0
    %v385 = vadd.f32 0.0, %v384
    %386 = vdwg.mxu0
    %v387 = vld [vmem:[#allocation5 + $0x20] sm:$0xff]
    %v389 = vsel %vm148, %v382, 0
    %v392 = vsel %vm148, %v385, 0
    %394 = vmatpush.msra.mxu0 0.0
    %395 = vmatpush.msra.mxu0 0.0
    %396 = vmatpush.msra.mxu0 0.0
    %397 = vmatpush.msra.mxu0 0.0
    %398 = vmatpush.msra.mxu0 0.0
    %399 = vmatpush.msra.mxu0 0.0
    %400 = vmatpush.msra.mxu0 0.0
    %401 = vmatpush.msra.mxu0 0.0
    %402 = vmatpush.msra.mxu0 0.0
    %403 = vmatpush.msra.mxu0 0.0
    %404 = vmatpush.msra.mxu0 0.0
    %405 = vmatpush.msra.mxu0 0.0
    %406 = vmatpush.msra.mxu0 0.0
    %407 = vmatpush.msra.mxu0 0.0
    %408 = vmatpush.msra.mxu0 0.0
    %409 = vmatpush.msra.mxu0 %v387
    %410 = vmatmul.f32.gmra.mxu0 %v389
    %v411 = vpop.f32.mrf.mxu0
    %v412 = vadd.f32 0.0, %v411
    %413 = vmatmul.f32.gmra.mxu0 %v392
    %v414 = vpop.f32.mrf.mxu0
    %v415 = vadd.f32 0.0, %v414
    %416 = vdwg.mxu0
    %v418 = vsel %vm148, %v259, 0
    %v421 = vsel %vm148, %v262, 0
    %423 = vmatpush.msra.mxu0 0.0
    %424 = vmatpush.msra.mxu0 0.0
    %425 = vmatpush.msra.mxu0 0.0
    %426 = vmatpush.msra.mxu0 0.0
    %427 = vmatpush.msra.mxu0 0.0
    %428 = vmatpush.msra.mxu0 0.0
    %429 = vmatpush.msra.mxu0 0.0
    %430 = vmatpush.msra.mxu0 0.0
    %431 = vmatpush.msra.mxu0 0.0
    %432 = vmatpush.msra.mxu0 0.0
    %433 = vmatpush.msra.mxu0 0.0
    %434 = vmatpush.msra.mxu0 0.0
    %435 = vmatpush.msra.mxu0 0.0
    %436 = vmatpush.msra.mxu0 0.0
    %437 = vmatpush.msra.mxu0 0.0
    %438 = vmatpush.msra.mxu0 %v264
    %439 = vmatmul.f32.gmra.mxu0 %v418
    %v440 = vpop.f32.mrf.mxu0
    %v441 = vadd.f32 %v412, %v440
    %442 = vmatmul.f32.gmra.mxu0 %v421
    %v443 = vpop.f32.mrf.mxu0
    %v444 = vadd.f32 %v415, %v443
    %445 = vdwg.mxu0
    %446 = vrot.lane.b32.xlu0 %v92, 112
    %v447 = vpop.permute.xlu0 %446
    %448 = vrot.lane.b32.xlu0 %v95, 112
    %v449 = vpop.permute.xlu0 %448
    %450 = vrot.lane.b32.xlu0 %v92, 88
    %v451 = vpop.permute.xlu0 %450
    %452 = vrot.lane.b32.xlu0 %v95, 88
    %v453 = vpop.permute.xlu0 %452
    %v454 = vsel %vm148, %v447, 0
    %v456 = vsel %vm148, %v449, 0
    %v458 = vsel %vm148, %v451, 0
    %v460 = vsel %vm148, %v453, 0
    %462 = vmatpush.xpose.msra.mxu0 0.0
    %463 = vmatpush.xpose.msra.mxu0 0.0
    %464 = vmatpush.xpose.msra.mxu0 0.0
    %465 = vmatpush.xpose.msra.mxu0 0.0
    %466 = vmatpush.xpose.msra.mxu0 0.0
    %467 = vmatpush.xpose.msra.mxu0 0.0
    %468 = vmatpush.xpose.msra.mxu0 0.0
    %469 = vmatpush.xpose.msra.mxu0 0.0
    %470 = vmatpush.xpose.msra.mxu0 0.0
    %471 = vmatpush.xpose.msra.mxu0 0.0
    %472 = vmatpush.xpose.msra.mxu0 0.0
    %473 = vmatpush.xpose.msra.mxu0 0.0
    %474 = vmatpush.xpose.msra.mxu0 0.0
    %475 = vmatpush.xpose.msra.mxu0 0.0
    %476 = vmatpush.xpose.msra.mxu0 %v460
    %477 = vmatpush.xpose.msra.mxu0 %v458
    %478 = vmatmul.f32.gmra.mxu0 %v454
    %v479 = vpop.f32.mrf.mxu0
    %v480 = vadd.f32 %v140, %v479
    %481 = vmatmul.f32.gmra.mxu0 %v456
    %v482 = vpop.f32.mrf.mxu0
    %v483 = vadd.f32 %v141, %v482
    %484 = vdwg.mxu0
    %v485 = vsel %vm180, %v480, -inf
    %486 = vmax.xlane.f32.xlu0 %v485
    %v487 = vpop.xlane.xlu0 %486
    %v488 = vsel %vm180, %v483, -inf
    %489 = vmax.xlane.f32.xlu0 %v488
    %v490 = vpop.xlane.xlu0 %489
    %v491 = vsub.f32 %v480, %v487
    %v492 = vsub.f32 %v483, %v490
    %v493 = vmul.f32 %v491, 1.442695
    %v494 = vpow.pop %v493
    %v495 = vmul.f32 %v492, 1.442695
    %v496 = vpow.pop %v495
    %v497 = vsel %vm180, %v494, 0.0
    %498 = vadd.xlane.f32.xlu0 %v497
    %v499 = vpop.xlane.xlu0 %498
    %v500 = vsel %vm180, %v496, 0.0
    %501 = vadd.xlane.f32.xlu0 %v500
    %v502 = vpop.xlane.xlu0 %501
    %v503 = vrcp.pop %v499
    %v504 = vmul.f32 %v499, %v503
    %v505 = vsub.f32 1.0, %v504
    %v506 = vmul.f32 %v503, %v505
    %v507 = vadd.f32 %v503, %v506
    %vm508 = vweird.f32 %v499
    %vm509 = vweird.f32 %v503
    %vm510 = vmor %vm508, %vm509
    %v511 = vsel %vm510, %v503, %v507
    %v512 = vand.u32 2147483647, %v499
    %vm513 = vcmp.eq.f32.partialorder %v512, 8.507059e+37
    %v514 = vand.u32 %v499, 2147483648
    %v515 = vor.u32 1.1754944e-38, %v514
    %v516 = vsel %vm513, %v515, %v511
    %v517 = vmul.f32 %v494, %v516
    %v518 = vrcp.pop %v502
    %v519 = vmul.f32 %v502, %v518
    %v520 = vsub.f32 1.0, %v519
    %v521 = vmul.f32 %v518, %v520
    %v522 = vadd.f32 %v518, %v521
    %vm523 = vweird.f32 %v502
    %vm524 = vweird.f32 %v518
    %vm525 = vmor %vm523, %vm524
    %v526 = vsel %vm525, %v518, %v522
    %v527 = vand.u32 2147483647, %v502
    %vm528 = vcmp.eq.f32.partialorder %v527, 8.507059e+37
    %v529 = vand.u32 %v502, 2147483648
    %v530 = vor.u32 1.1754944e-38, %v529
    %v531 = vsel %vm528, %v530, %v526
    %v532 = vmul.f32 %v496, %v531
    %533 = vrot.lane.b32.xlu0 %v92, 64
    %v534 = vpop.permute.xlu0 %533
    %535 = vrot.lane.b32.xlu0 %v95, 64
    %v536 = vpop.permute.xlu0 %535
    %v540 = vsel %vm180, %v517, 0
    %v543 = vsel %vm180, %v532, 0
    %545 = vmatpush.msra.mxu0 0.0
    %546 = vmatpush.msra.mxu0 0.0
    %547 = vmatpush.msra.mxu0 0.0
    %548 = vmatpush.msra.mxu0 0.0
    %549 = vmatpush.msra.mxu0 0.0
    %550 = vmatpush.msra.mxu0 0.0
    %551 = vmatpush.msra.mxu0 0.0
    %552 = vmatpush.msra.mxu0 0.0
    %553 = vmatpush.msra.mxu0 0.0
    %554 = vmatpush.msra.mxu0 0.0
    %555 = vmatpush.msra.mxu0 0.0
    %556 = vmatpush.msra.mxu0 0.0
    %557 = vmatpush.msra.mxu0 0.0
    %558 = vmatpush.msra.mxu0 0.0
    %559 = vmatpush.msra.mxu0 %v536
    %560 = vmatpush.msra.mxu0 %v534
    %561 = vmatmul.f32.gmra.mxu0 %v540
    %v562 = vpop.f32.mrf.mxu0
    %v563 = vadd.f32 0.0, %v562
    %564 = vmatmul.f32.gmra.mxu0 %v543
    %v565 = vpop.f32.mrf.mxu0
    %v566 = vadd.f32 0.0, %v565
    %567 = vdwg.mxu0
    %v568 = vld [vmem:[#allocation5 + $0x28] sm:$0xff]
    %v570 = vsel %vm148, %v563, 0
    %v573 = vsel %vm148, %v566, 0
    %575 = vmatpush.msra.mxu0 0.0
    %576 = vmatpush.msra.mxu0 0.0
    %577 = vmatpush.msra.mxu0 0.0
    %578 = vmatpush.msra.mxu0 0.0
    %579 = vmatpush.msra.mxu0 0.0
    %580 = vmatpush.msra.mxu0 0.0
    %581 = vmatpush.msra.mxu0 0.0
    %582 = vmatpush.msra.mxu0 0.0
    %583 = vmatpush.msra.mxu0 0.0
    %584 = vmatpush.msra.mxu0 0.0
    %585 = vmatpush.msra.mxu0 0.0
    %586 = vmatpush.msra.mxu0 0.0
    %587 = vmatpush.msra.mxu0 0.0
    %588 = vmatpush.msra.mxu0 0.0
    %589 = vmatpush.msra.mxu0 0.0
    %590 = vmatpush.msra.mxu0 %v568
    %591 = vmatmul.f32.gmra.mxu0 %v570
    %v592 = vpop.f32.mrf.mxu0
    %v593 = vadd.f32 0.0, %v592
    %594 = vmatmul.f32.gmra.mxu0 %v573
    %v595 = vpop.f32.mrf.mxu0
    %v596 = vadd.f32 0.0, %v595
    %597 = vdwg.mxu0
    %v598 = vadd.f32 %v441, %v593
    %v599 = vadd.f32 %v444, %v596
    %v600 = vperm.slane %v61, 0
    %v601 = vadd.f32 %v598, %v600
    %v602 = vadd.f32 %v599, %v600
    %v603 = vadd.f32 %v44, %v601
    %v604 = vadd.f32 %v45, %v602
    %v605 = vsel %vm67, %v603, 0.0
    %606 = vadd.xlane.f32.xlu0 %v605
    %v607 = vpop.xlane.xlu0 %606
    %v608 = vsel %vm67, %v604, 0.0
    %609 = vadd.xlane.f32.xlu0 %v608
    %v610 = vpop.xlane.xlu0 %609
    %v611 = vrcp.pop 24.0
    %v612 = vmul.f32 24.0, %v611
    %v613 = vsub.f32 1.0, %v612
    %v614 = vmul.f32 %v611, %v613
    %v615 = vadd.f32 %v611, %v614
    %vm616 = vweird.f32 %v611
    %v617 = vsel %vm616, %v611, %v615
    %v618 = vmul.f32 %v607, %v617
    %v619 = vmul.f32 %v610, %v617
    %v620 = vsub.f32 %v603, %v618
    %v621 = vsub.f32 %v604, %v619
    %v622 = vmul.f32 %v620, %v620
    %v623 = vmul.f32 %v621, %v621
    %v624 = vsel %vm67, %v622, 0.0
    %625 = vadd.xlane.f32.xlu0 %v624
    %v626 = vpop.xlane.xlu0 %625
    %v627 = vsel %vm67, %v623, 0.0
    %628 = vadd.xlane.f32.xlu0 %v627
    %v629 = vpop.xlane.xlu0 %628
    %v630 = vmul.f32 %v626, %v617
    %v631 = vmul.f32 %v629, %v617
    %v632 = vadd.f32 %v630, 1e-05
    %v633 = vadd.f32 %v631, 1e-05
    %v634 = vrsqrt.pop %v632
    %v635 = vmul.f32 %v634, %v632
    %v636 = vmul.f32 %v635, %v634
    %v637 = vmul.f32 0.5, %v636
    %v638 = vsub.f32 1.5, %v637
    %v639 = vmul.f32 %v634, %v638
    %vm640 = vweird.f32 %v632
    %vm641 = vweird.f32 %v634
    %vm642 = vmor %vm640, %vm641
    %v643 = vsel %vm642, %v634, %v639
    %v644 = vrsqrt.pop %v633
    %v645 = vmul.f32 %v644, %v633
    %v646 = vmul.f32 %v645, %v644
    %v647 = vmul.f32 0.5, %v646
    %v648 = vsub.f32 1.5, %v647
    %v649 = vmul.f32 %v644, %v648
    %vm650 = vweird.f32 %v633
    %vm651 = vweird.f32 %v644
    %vm652 = vmor %vm650, %vm651
    %v653 = vsel %vm652, %v644, %v649
    %v654 = vmul.f32 %v620, %v643
    %v655 = vmul.f32 %v621, %v653
    %v656 = vperm.slane %v64, 0
    %v657 = vmul.f32 %v654, %v656
    %v658 = vmul.f32 %v655, %v656
    %v659 = vperm.slane %v65, 0
    %v660 = vadd.f32 %v657, %v659
    %v661 = vadd.f32 %v658, %v659
    %v662 = vperm.slane %v62, 0
    %v664 = vsel %vm67, %v660, 0
    %v667 = vsel %vm67, %v661, 0
    %669 = vmatpush.msra.mxu0 0.0
    %670 = vmatpush.msra.mxu0 0.0
    %671 = vmatpush.msra.mxu0 0.0
    %672 = vmatpush.msra.mxu0 0.0
    %673 = vmatpush.msra.mxu0 0.0
    %674 = vmatpush.msra.mxu0 0.0
    %675 = vmatpush.msra.mxu0 0.0
    %676 = vmatpush.msra.mxu0 0.0
    %677 = vmatpush.msra.mxu0 0.0
    %678 = vmatpush.msra.mxu0 0.0
    %679 = vmatpush.msra.mxu0 0.0
    %680 = vmatpush.msra.mxu0 0.0
    %681 = vmatpush.msra.mxu0 0.0
    %682 = vmatpush.msra.mxu0 %v51
    %683 = vmatpush.msra.mxu0 %v50
    %684 = vmatpush.msra.mxu0 %v49
    %685 = vmatmul.f32.gmra.mxu0 %v664
    %v686 = vpop.f32.mrf.mxu0
    %v687 = vadd.f32 %v662, %v686
    %688 = vmatmul.f32.gmra.mxu0 %v667
    %v689 = vpop.f32.mrf.mxu0
    %v690 = vadd.f32 %v662, %v689
    %691 = vdwg.mxu0
    %v692 = vmax.f32 %v687, 0.0
    %v693 = vmax.f32 %v690, 0.0
    %v694 = vperm.slane %v63, 0
    %vm695 = vcmask 523264
    %v697 = vsel %vm695, %v692, 0
    %v700 = vsel %vm695, %v693, 0
    %702 = vmatpush.msra.mxu0 0.0
    %703 = vmatpush.msra.mxu0 0.0
    %704 = vmatpush.msra.mxu0 0.0
    %705 = vmatpush.msra.mxu0 0.0
    %706 = vmatpush.msra.mxu0 0.0
    %707 = vmatpush.msra.mxu0 0.0
    %708 = vmatpush.msra.mxu0 0.0
    %709 = vmatpush.msra.mxu0 0.0
    %710 = vmatpush.msra.mxu0 %v59
    %711 = vmatpush.msra.mxu0 %v58
    %712 = vmatpush.msra.mxu0 %v57
    %713 = vmatpush.msra.mxu0 %v56
    %714 = vmatpush.msra.mxu0 %v55
    %715 = vmatpush.msra.mxu0 %v54
    %716 = vmatpush.msra.mxu0 %v53
    %717 = vmatpush.msra.mxu0 %v52
    %718 = vmatmul.f32.gmra.mxu0 %v697
    %v719 = vpop.f32.mrf.mxu0
    %v720 = vadd.f32 %v694, %v719
    %721 = vmatmul.f32.gmra.mxu0 %v700
    %v722 = vpop.f32.mrf.mxu0
    %v723 = vadd.f32 %v694, %v722
    %724 = vdwg.mxu0
    %v725 = vadd.f32 %v660, %v720
    %v726 = vadd.f32 %v661, %v723
    %v727 = vsel %vm67, %v725, 0.0
    %728 = vadd.xlane.f32.xlu0 %v727
    %v729 = vpop.xlane.xlu0 %728
    %v730 = vsel %vm67, %v726, 0.0
    %731 = vadd.xlane.f32.xlu0 %v730
    %v732 = vpop.xlane.xlu0 %731
    %v733 = vmul.f32 %v729, %v617
    %v734 = vmul.f32 %v732, %v617
    %v735 = vsub.f32 %v725, %v733
    %v736 = vsub.f32 %v726, %v734
    %v737 = vmul.f32 %v735, %v735
    %v738 = vmul.f32 %v736, %v736
    %v739 = vsel %vm67, %v737, 0.0
    %740 = vadd.xlane.f32.xlu0 %v739
    %v741 = vpop.xlane.xlu0 %740
    %v742 = vsel %vm67, %v738, 0.0
    %743 = vadd.xlane.f32.xlu0 %v742
    %v744 = vpop.xlane.xlu0 %743
    %v745 = vmul.f32 %v741, %v617
    %v746 = vmul.f32 %v744, %v617
    %v747 = vadd.f32 %v745, 1e-05
    %v748 = vadd.f32 %v746, 1e-05
    %v749 = vrsqrt.pop %v747
    %v750 = vmul.f32 %v749, %v747
    %v751 = vmul.f32 %v750, %v749
    %v752 = vmul.f32 0.5, %v751
    %v753 = vsub.f32 1.5, %v752
    %v754 = vmul.f32 %v749, %v753
    %vm755 = vweird.f32 %v747
    %vm756 = vweird.f32 %v749
    %vm757 = vmor %vm755, %vm756
    %v758 = vsel %vm757, %v749, %v754
    %v759 = vrsqrt.pop %v748
    %v760 = vmul.f32 %v759, %v748
    %v761 = vmul.f32 %v760, %v759
    %v762 = vmul.f32 0.5, %v761
    %v763 = vsub.f32 1.5, %v762
    %v764 = vmul.f32 %v759, %v763
    %vm765 = vweird.f32 %v748
    %vm766 = vweird.f32 %v759
    %vm767 = vmor %vm765, %vm766
    %v768 = vsel %vm767, %v759, %v764
    %v769 = vmul.f32 %v735, %v758
    %v770 = vmul.f32 %v736, %v768
    %v771 = vmul.f32 %v769, %v656
    %v772 = vmul.f32 %v770, %v656
    %v773 = vadd.f32 %v771, %v659
    %v774 = vadd.f32 %v772, %v659
    %775 = vst.msk [vmem:[#allocation7] sm:$0xff] %vm67, %v773
    %776 = vst.msk [vmem:[#allocation7 + $0x8] sm:$0xff] %vm67, %v774
    // Predicated region
    $region18: #{tpu_custom_call.1} parent=1 // pred_check
      _
    $region19: #{tpu_custom_call.1} parent=1 // pred_check_branch
      %778 = sbr.rel (0) target = $region21
    $region20: #{tpu_custom_call.1} parent=1 // pred_region
      %780 = vsyncadd [#allocation4], 0
      %s781 = sshll.u32 [#allocation7], 4
      %s782 = int_to_ptr.vmem [resolvable:$true] %s781
      %s783 = sshll.u32 %s2, 4
      %s784 = int_to_ptr.hbm [resolvable:$true] %s783
      %789 = dma.vmem_to_hbm [thread:$0]  %s782, 256, %s784, [#allocation4], 128, 128, 8
    $region21: #{tpu_custom_call.1} parent=1 // pred_fallthru
      _
    // Predicated region
    $region22: #{tpu_custom_call.1} parent=1 // pred_check
      _
    $region23: #{tpu_custom_call.1} parent=1 // pred_check_branch
      %791 = sbr.rel (0) target = $region25
    $region24: #{tpu_custom_call.1} parent=1 // pred_region
      %793 = dma.done [#allocation4], 256
    $region25: #{tpu_custom_call.1} parent=1 // pred_fallthru
      _
    %794 = vsyncpa [#allocation3], 1
    %795 = vsyncpa [#allocation6], 1
    %796 = vsyncpa [#allocation4], 1

</llo_original>
